<compile_context>
chip_gen: v5e
topology: v5e:2x2
jax: 0.10.0
libtpu: 0.0.40
codegen_flags: <defaults>
</compile_context>

<pallas_src>
import functools

import jax
import jax.numpy as jnp
from jax.experimental import pallas as pl
from jax.experimental.pallas import tpu as pltpu


def _round_up(x: int, m: int) -> int:
    return (x + m - 1) // m * m


def _pick_row_tile(mp: int, cap: int = 1024) -> int:
    """Largest multiple-of-8 divisor of `mp` that is <= cap, preferring a
    choice that leaves >= 2 grid steps (megacore on v7x) when mp >= 16."""
    if mp <= 8:
        return mp
    best = 8
    for t in range(8, min(cap, mp) + 1, 8):
        if mp % t == 0 and mp // t >= 2:
            best = t
    return best


def _pad_rows(x, mp):
    """Zero-pad rows of a 2-D array to `mp` (no-op if already mp rows)."""
    m = x.shape[0]
    if m == mp:
        return x
    return jnp.zeros((mp,) + x.shape[1:], x.dtype).at[:m].set(x)


# ---------------------------------------------------------------------------
# Fused kernel:  y = relu(x @ W1 + b1) @ W2 + b2      (single pallas_call)
#   x  : (tm, K)    -- K unpadded (full-extent block dim is legal)
#   W1 : (K, Hp)    -- hidden dim lane-padded to a multiple of 128
#   b1 : (1, Hp)
#   W2 : (Hp, N)    -- contraction padded to Hp, output dim unpadded
#   b2 : (1, N)
# ---------------------------------------------------------------------------
def _fused_mlp_kernel(x_ref, w1_ref, b1_ref, w2_ref, b2_ref, o_ref, *,
                      bf16_dot: bool):
    x = x_ref[...]
    w1 = w1_ref[...]
    if bf16_dot:
        x = x.astype(jnp.bfloat16)
        w1 = w1.astype(jnp.bfloat16)
    h = jnp.dot(x, w1, preferred_element_type=jnp.float32)
    h = jnp.maximum(h + b1_ref[...].astype(jnp.float32), 0.0)  # f32 epilogue

    w2 = w2_ref[...]
    if bf16_dot:
        h = h.astype(jnp.bfloat16)
        w2 = w2.astype(jnp.bfloat16)
    else:
        h = h.astype(w2.dtype)
    y = jnp.dot(h, w2, preferred_element_type=jnp.float32)
    o_ref[...] = (y + b2_ref[...].astype(jnp.float32)).astype(o_ref.dtype)


@functools.partial(jax.jit, static_argnames=("bf16_dot",))
def mlp_forward(x, w1p, b1p, w2p, b2p, *, bf16_dot=False):
    """x: (M, K) unpadded.  w1p: (K, Hp), b1p: (1, Hp), w2p: (Hp, N),
    b2p: (1, N).  Returns (M, N)."""
    M, K = x.shape
    H1 = w1p.shape[1]
    Hp2, n_out = w2p.shape

    Mp = max(_round_up(M, 8), 8)
    xp = _pad_rows(x, Mp)                    # no-op when M % 8 == 0
    tm = _pick_row_tile(Mp, cap=1024)

    out = pl.pallas_call(
        functools.partial(_fused_mlp_kernel, bf16_dot=bf16_dot),
        out_shape=jax.ShapeDtypeStruct((Mp, n_out), x.dtype),
        grid=(Mp // tm,),
        in_specs=[
            pl.BlockSpec((tm, K), lambda i: (i, 0)),
            pl.BlockSpec((K, H1), lambda i: (0, 0)),
            pl.BlockSpec((1, H1), lambda i: (0, 0)),
            pl.BlockSpec((Hp2, n_out), lambda i: (0, 0)),
            pl.BlockSpec((1, n_out), lambda i: (0, 0)),
        ],
        out_specs=pl.BlockSpec((tm, n_out), lambda i: (i, 0)),
        compiler_params=pltpu.CompilerParams(
            dimension_semantics=("parallel",)),
    )(xp, w1p, b1p, w2p, b2p)
    return out if Mp == M else out[:M]


# ---------------------------------------------------------------------------
# Fallback single-Linear kernel (ReLU fused into the epilogue when possible)
# ---------------------------------------------------------------------------
def _linear_kernel(x_ref, w_ref, b_ref, o_ref, *, apply_relu: bool):
    y = jnp.dot(x_ref[...], w_ref[...], preferred_element_type=jnp.float32)
    y = y + b_ref[...].astype(jnp.float32)
    if apply_relu:
        y = jnp.maximum(y, 0.0)
    o_ref[...] = y.astype(o_ref.dtype)


@functools.partial(jax.jit, static_argnames=("apply_relu", "rows_prepadded"))
def linear_forward(x, w, b_row, *, apply_relu=False, rows_prepadded=False):
    """x: (M, K), w: (K, N) unpadded, b_row: (1, N).  Returns (M, N)."""
    M, K = x.shape
    N = w.shape[1]
    if rows_prepadded:
        Mp, xp = M, x
    else:
        Mp = max(_round_up(M, 8), 8)
        xp = _pad_rows(x, Mp)
    tm = _pick_row_tile(Mp, cap=1024)

    out = pl.pallas_call(
        functools.partial(_linear_kernel, apply_relu=apply_relu),
        out_shape=jax.ShapeDtypeStruct((Mp, N), x.dtype),
        grid=(Mp // tm,),
        in_specs=[
            pl.BlockSpec((tm, K), lambda i: (i, 0)),
            pl.BlockSpec((K, N), lambda i: (0, 0)),
            pl.BlockSpec((1, N), lambda i: (0, 0)),
        ],
        out_specs=pl.BlockSpec((tm, N), lambda i: (i, 0)),
        compiler_params=pltpu.CompilerParams(
            dimension_semantics=("parallel",)),
    )(xp, w, b_row)
    return out if (rows_prepadded or Mp == M) else out[:M]


# ---------------------------------------------------------------------------
# Standalone elementwise ReLU kernel (row-tiled; only used when ReLU is not
# adjacent to a Linear in the container)
# ---------------------------------------------------------------------------
def _relu_kernel(x_ref, o_ref):
    o_ref[...] = jnp.maximum(x_ref[...], 0.0)


@functools.partial(jax.jit, static_argnames=("rows_prepadded",))
def relu_forward(x, *, rows_prepadded=False):
    M, N = x.shape
    if rows_prepadded:
        Mp, xp = M, x
    else:
        Mp = max(_round_up(M, 8), 8)
        xp = _pad_rows(x, Mp)
    # Cap the row tile so a block stays around <= 2 MiB (pipelining-friendly,
    # well under scoped VMEM on all generations).
    bytes_per_row = max(N * x.dtype.itemsize, 1)
    cap = max(8, min(1024, ((2 * 1024 * 1024) // bytes_per_row) // 8 * 8))
    tm = _pick_row_tile(Mp, cap=cap)

    out = pl.pallas_call(
        _relu_kernel,
        out_shape=jax.ShapeDtypeStruct((Mp, N), x.dtype),
        grid=(Mp // tm,),
        in_specs=[pl.BlockSpec((tm, N), lambda i: (i, 0))],
        out_specs=pl.BlockSpec((tm, N), lambda i: (i, 0)),
        compiler_params=pltpu.CompilerParams(
            dimension_semantics=("parallel",)),
    )(xp)
    return out if (rows_prepadded or Mp == M) else out[:M]


# ---------------------------------------------------------------------------
# Modules
# ---------------------------------------------------------------------------
class Linear:
    def __init__(self, key, in_features, out_features, dtype=jnp.float32):
        self.in_features = in_features
        self.out_features = out_features
        kw, kb = jax.random.split(key)
        bound = 1.0 / (in_features ** 0.5)
        # Deterministic init, same fan-in scaling as torch.nn.Linear.
        self.w = jax.random.uniform(kw, (in_features, out_features), dtype,
                                    minval=-bound, maxval=bound)
        self.b = jax.random.uniform(kb, (out_features,), dtype,
                                    minval=-bound, maxval=bound)

        Np = _round_up(out_features, 128)
        Kp = _round_up(in_features, 128)
        # Output-dim (lane) padded: used when this layer feeds the lane-dense
        # hidden of the fused MLP path (zeros propagate exactly through
        # bias + ReLU + next matmul).
        self.w_colpad = (jnp.zeros((in_features, Np), dtype)
                         .at[:, :out_features].set(self.w))
        self.b_colpad = (jnp.zeros((1, Np), dtype)
                         .at[0, :out_features].set(self.b))
        # Contraction-dim padded, output unpadded: used as the final linear of
        # the fused MLP path (its input `h` is lane-padded to Kp with zeros).
        self.w_rowpad = (jnp.zeros((Kp, out_features), dtype)
                         .at[:in_features].set(self.w))
        self.b_row = self.b.reshape(1, out_features)
        # TODO(synk): store bf16 copies of the padded weights to halve their
        # DMA bytes once exact f32 parity with the reference can be relaxed.

    def __call__(self, x, apply_relu=False, rows_prepadded=False):
        return linear_forward(x, self.w, self.b_row, apply_relu=apply_relu,
                              rows_prepadded=rows_prepadded)


class ReLU:
    def __call__(self, x, rows_prepadded=False):
        return relu_forward(x, rows_prepadded=rows_prepadded)


class Sequential:
    """Applies each child module in order: x = m(x) for m in module_list.

    The Linear->ReLU->Linear pattern is dispatched to a single fused Pallas
    kernel (identical math, no intermediate HBM round trips); anything else
    falls back to per-module execution with ReLU fused into a preceding
    Linear's epilogue when adjacent.  In the fallback, rows are padded once
    at the container boundary and kept padded between modules.
    """

    def __init__(self, *args):
        self.module_list = list(args)

    def __call__(self, x):
        mods = self.module_list
        # Fully fused fast path.
        if (len(mods) == 3 and isinstance(mods[0], Linear)
                and isinstance(mods[1], ReLU) and isinstance(mods[2], Linear)):
            l1, _, l2 = mods
            return mlp_forward(x, l1.w_colpad, l1.b_colpad,
                               l2.w_rowpad, l2.b_row)

        # Generic container semantics: pad rows once, keep padded, slice once.
        M = x.shape[0]
        Mp = max(_round_up(M, 8), 8)
        x = _pad_rows(x, Mp)
        i = 0
        while i < len(mods):
            m = mods[i]
            if (isinstance(m, Linear) and i + 1 < len(mods)
                    and isinstance(mods[i + 1], ReLU)):
                x = m(x, apply_relu=True, rows_prepadded=True)
                i += 2
            elif isinstance(m, (Linear, ReLU)):
                x = m(x, rows_prepadded=True)
                i += 1
            else:
                x = m(x)
                i += 1
        return x if Mp == M else x[:M]


if __name__ == "__main__":
    key = jax.random.PRNGKey(0)
    k_x, k_l1, k_l2 = jax.random.split(key, 3)

    batch, d_in, d_hidden, d_out = 8, 32, 64, 16
    x = jax.random.normal(k_x, (batch, d_in), jnp.float32)

    l1 = Linear(k_l1, d_in, d_hidden)
    l2 = Linear(k_l2, d_hidden, d_out)
    model = Sequential(l1, ReLU(), l2)

    # --- fused fast path (f32, exact) --------------------------------------
    out = jax.block_until_ready(model(x))
    ref = jnp.maximum(x @ l1.w + l1.b, 0.0) @ l2.w + l2.b
    assert out.shape == (batch, d_out)
    assert jnp.allclose(out, ref, atol=1e-5, rtol=1e-5)

    # --- fused fast path with a ragged batch (row padding inside wrapper) ---
    out5 = jax.block_until_ready(model(x[:5]))
    assert out5.shape == (5, d_out)
    assert jnp.allclose(out5, ref[:5], atol=1e-5, rtol=1e-5)

    # --- optional bf16 MXU path (f32 epilogue, looser tolerance) ------------
    out_bf16 = jax.block_until_ready(
        mlp_forward(x, l1.w_colpad, l1.b_colpad, l2.w_rowpad, l2.b_row,
                    bf16_dot=True))
    assert out_bf16.shape == (batch, d_out)
    assert jnp.allclose(out_bf16, ref, atol=1e-1, rtol=1e-1)

    # --- generic container fallback (standalone ReLU + Linear[+ReLU]) -------
    fb_model = Sequential(ReLU(), l1, ReLU(), l2)
    out_fb = jax.block_until_ready(fb_model(x))
    xr = jnp.maximum(x, 0.0)
    ref_fb = jnp.maximum(xr @ l1.w + l1.b, 0.0) @ l2.w + l2.b
    assert out_fb.shape == (batch, d_out)
    assert jnp.allclose(out_fb, ref_fb, atol=1e-5, rtol=1e-5)

    print("KERNEL_OK")
</pallas_src>

<mosaic_0001>
module attributes {stable_mosaic.version = 11 : i64} {
  func.func @_fused_mlp_kernel(%arg0: i32, %arg1: memref<8x32xf32, #tpu.memory_space<vmem>>, %arg2: memref<32x128xf32, #tpu.memory_space<vmem>>, %arg3: memref<1x128xf32, #tpu.memory_space<vmem>>, %arg4: memref<128x16xf32, #tpu.memory_space<vmem>>, %arg5: memref<1x16xf32, #tpu.memory_space<vmem>>, %arg6: memref<8x16xf32, #tpu.memory_space<vmem>>) attributes {dimension_semantics = [#tpu.dimension_semantics<parallel>], iteration_bounds = array<i64: 1>, scalar_prefetch = 0 : i64, scratch_operands = 0 : i64, tpu.core_type = #tpu.core_type<tc>, window_params = [{transform_indices = @transform_0, window_bounds = array<i64: 8, 32>}, {pipeline_mode = #tpu.pipeline_mode<synchronous>, transform_indices = @transform_1, window_bounds = array<i64: 32, 128>}, {pipeline_mode = #tpu.pipeline_mode<synchronous>, transform_indices = @transform_2, window_bounds = array<i64: 1, 128>}, {pipeline_mode = #tpu.pipeline_mode<synchronous>, transform_indices = @transform_3, window_bounds = array<i64: 128, 16>}, {pipeline_mode = #tpu.pipeline_mode<synchronous>, transform_indices = @transform_4, window_bounds = array<i64: 1, 16>}, {transform_indices = @transform_5, window_bounds = array<i64: 8, 16>}]} {
    %c0 = arith.constant 0 : index
    %c0_0 = arith.constant 0 : index
    %0 = vector.load %arg1[%c0, %c0_0] : memref<8x32xf32, #tpu.memory_space<vmem>>, vector<8x32xf32>
    %c0_1 = arith.constant 0 : index
    %c0_2 = arith.constant 0 : index
    %1 = vector.load %arg2[%c0_1, %c0_2] : memref<32x128xf32, #tpu.memory_space<vmem>>, vector<32x128xf32>
    %cst = arith.constant dense<0.000000e+00> : vector<8x128xf32>
    %2 = tpu.matmul %0, %1, %cst {dimension_numbers = #tpu.dot_dimension_numbers<[1], [0], [0], [1], [0, 0, 1, 1], [], []>} : vector<8x32xf32>, vector<32x128xf32>, vector<8x128xf32> -> vector<8x128xf32>
    %c0_3 = arith.constant 0 : index
    %c0_4 = arith.constant 0 : index
    %3 = vector.load %arg3[%c0_3, %c0_4] : memref<1x128xf32, #tpu.memory_space<vmem>>, vector<1x128xf32>
    %4 = vector.broadcast %3 : vector<1x128xf32> to vector<8x128xf32>
    %5 = arith.addf %2, %4 : vector<8x128xf32>
    %cst_5 = arith.constant 0.000000e+00 : f32
    %6 = vector.broadcast %cst_5 : f32 to vector<8x128xf32>
    %7 = arith.maximumf %5, %6 : vector<8x128xf32>
    %c0_6 = arith.constant 0 : index
    %c0_7 = arith.constant 0 : index
    %8 = vector.load %arg4[%c0_6, %c0_7] : memref<128x16xf32, #tpu.memory_space<vmem>>, vector<128x16xf32>
    %cst_8 = arith.constant dense<0.000000e+00> : vector<8x16xf32>
    %9 = tpu.matmul %7, %8, %cst_8 {dimension_numbers = #tpu.dot_dimension_numbers<[1], [0], [0], [1], [0, 0, 1, 1], [], []>} : vector<8x128xf32>, vector<128x16xf32>, vector<8x16xf32> -> vector<8x16xf32>
    %c0_9 = arith.constant 0 : index
    %c0_10 = arith.constant 0 : index
    %10 = vector.load %arg5[%c0_9, %c0_10] : memref<1x16xf32, #tpu.memory_space<vmem>>, vector<1x16xf32>
    %11 = vector.broadcast %10 : vector<1x16xf32> to vector<8x16xf32>
    %12 = arith.addf %9, %11 : vector<8x16xf32>
    %c0_11 = arith.constant 0 : index
    %c0_12 = arith.constant 0 : index
    %13 = vector.load %arg6[%c0_11, %c0_12] : memref<8x16xf32, #tpu.memory_space<vmem>>, vector<8x16xf32>
    tpu.vector_store %arg6[%c0_11, %c0_12], %12 {strides = array<i32>} : memref<8x16xf32, #tpu.memory_space<vmem>>, vector<8x16xf32>,
    return
  }
  func.func @transform_0(%arg0: i32) -> (i32, i32) {
    %c0_i32 = arith.constant 0 : i32
    %c0_i32_0 = arith.constant 0 : i32
    return %arg0, %c0_i32 : i32, i32
  }
  func.func @transform_1(%arg0: i32) -> (i32, i32) {
    %c0_i32 = arith.constant 0 : i32
    %c0_i32_0 = arith.constant 0 : i32
    %c0_i32_1 = arith.constant 0 : i32
    return %c0_i32, %c0_i32_0 : i32, i32
  }
  func.func @transform_2(%arg0: i32) -> (i32, i32) {
    %c0_i32 = arith.constant 0 : i32
    %c0_i32_0 = arith.constant 0 : i32
    %c0_i32_1 = arith.constant 0 : i32
    return %c0_i32, %c0_i32_0 : i32, i32
  }
  func.func @transform_3(%arg0: i32) -> (i32, i32) {
    %c0_i32 = arith.constant 0 : i32
    %c0_i32_0 = arith.constant 0 : i32
    %c0_i32_1 = arith.constant 0 : i32
    return %c0_i32, %c0_i32_0 : i32, i32
  }
  func.func @transform_4(%arg0: i32) -> (i32, i32) {
    %c0_i32 = arith.constant 0 : i32
    %c0_i32_0 = arith.constant 0 : i32
    %c0_i32_1 = arith.constant 0 : i32
    return %c0_i32, %c0_i32_0 : i32, i32
  }
  func.func @transform_5(%arg0: i32) -> (i32, i32) {
    %c0_i32 = arith.constant 0 : i32
    %c0_i32_0 = arith.constant 0 : i32
    return %arg0, %c0_i32 : i32, i32
  }
}

</mosaic_0001>

<llo_original>
// kernel: mlp_forward.1
$region0: #{mlp_forward.1}
  #allocation0 [shape = 'u32[]', space=smem, size = 0x4, offset = 0x4, fixed_abs, tag = 'smem constant byte address 0x4 - core index']
  #allocation1 [shape = 'u32[72,128]{1,0:T(1,128)}', space=vmem, size = 0x9000, scoped, tag = 'internal scratch']
  %s0 = inlined_call_operand.vmem [shape: f32[8,32], index: 0, kind: input, shape index: {}]
  %s1 = inlined_call_operand.vmem [shape: f32[32,128], index: 1, kind: input, shape index: {}]
  %s2 = inlined_call_operand.vmem [shape: f32[1,128], index: 2, kind: input, shape index: {}]
  %s3 = inlined_call_operand.vmem [shape: f32[128,16], index: 3, kind: input, shape index: {}]
  %s4 = inlined_call_operand.vmem [shape: f32[1,16], index: 4, kind: input, shape index: {}]
  %s5 = inlined_call_operand.hbm [shape: f32[8,16], index: 5, kind: output, shape index: {}]
  %s6 = sld [smem:[#allocation0]]
  $region30: #{mlp_forward.1} parent=0
    _
  %s8 = ssub.s32 1, %s6
  %s9 = scalar_select 0, %s8, %s6
  $region1: #{mlp_forward.1} parent=0
    #allocation2 [shape = 'u8[4096]{0}', space=vmem, size = 0x1000, scoped, tag = 'output window, operand 0, single buffered']
    #allocation3 [shape = 's32[1]{0}', space=sflag, size = 0x4, scoped, tag = 'scoped memory for mlp_forward.1']
    %10 = vsyncpa [#allocation3], 0
    // Predicated region
    $region2: #{mlp_forward.1} parent=1 // pred_check
      _
    $region3: #{mlp_forward.1} parent=1 // pred_check_branch
      %12 = sbr.rel (0) target = $region5
    $region4: #{mlp_forward.1} parent=1 // pred_region
      _
    $region5: #{mlp_forward.1} parent=1 // pred_fallthru
      _
    // Predicated region
    $region6: #{mlp_forward.1} parent=1 // pred_check
      _
    $region7: #{mlp_forward.1} parent=1 // pred_check_branch
      %14 = sbr.rel (0) target = $region9
    $region8: #{mlp_forward.1} parent=1 // pred_region
      _
    $region9: #{mlp_forward.1} parent=1 // pred_fallthru
      _
    // Predicated region
    $region10: #{mlp_forward.1} parent=1 // pred_check
      _
    $region11: #{mlp_forward.1} parent=1 // pred_check_branch
      %16 = sbr.rel (0) target = $region13
    $region12: #{mlp_forward.1} parent=1 // pred_region
      _
    $region13: #{mlp_forward.1} parent=1 // pred_fallthru
      _
    // Predicated region
    $region14: #{mlp_forward.1} parent=1 // pred_check
      _
    $region15: #{mlp_forward.1} parent=1 // pred_check_branch
      %18 = sbr.rel (0) target = $region17
    $region16: #{mlp_forward.1} parent=1 // pred_region
      _
    $region17: #{mlp_forward.1} parent=1 // pred_fallthru
      _
    // Predicated region
    $region18: #{mlp_forward.1} parent=1 // pred_check
      _
    $region19: #{mlp_forward.1} parent=1 // pred_check_branch
      %20 = sbr.rel (0) target = $region21
    $region20: #{mlp_forward.1} parent=1 // pred_region
      _
    $region21: #{mlp_forward.1} parent=1 // pred_fallthru
      _
    %v21 = vld [vmem:[%s0] sm:$0xff]
    %v22 = vld [vmem:[%s1] sm:$0xff]
    %v23 = vld [vmem:[%s1 + $0x8] sm:$0xff]
    %v24 = vld [vmem:[%s1 + $0x10] sm:$0xff]
    %v25 = vld [vmem:[%s1 + $0x18] sm:$0xff]
    %v26 = vld [vmem:[%s2] sm:$0x1]
    %v28 = vperm.slane %v26, 0
    %vm30 = vcmask 261120
    %v32 = vsel %vm30, %v21, 0
    %34 = vmatpush.msra.mxu0 0.0
    %35 = vmatpush.msra.mxu0 0.0
    %36 = vmatpush.msra.mxu0 0.0
    %37 = vmatpush.msra.mxu0 0.0
    %38 = vmatpush.msra.mxu0 0.0
    %39 = vmatpush.msra.mxu0 0.0
    %40 = vmatpush.msra.mxu0 0.0
    %41 = vmatpush.msra.mxu0 0.0
    %42 = vmatpush.msra.mxu0 0.0
    %43 = vmatpush.msra.mxu0 0.0
    %44 = vmatpush.msra.mxu0 0.0
    %45 = vmatpush.msra.mxu0 0.0
    %46 = vmatpush.msra.mxu0 %v25
    %47 = vmatpush.msra.mxu0 %v24
    %48 = vmatpush.msra.mxu0 %v23
    %49 = vmatpush.msra.mxu0 %v22
    %50 = vmatmul.f32.gmra.mxu0 %v32
    %v51 = vpop.f32.mrf.mxu0
    %v52 = vadd.f32 %v28, %v51
    %53 = vdwg.mxu0
    %v54 = vmax.f32 %v52, 0.0
    %v55 = vld [vmem:[%s3] sm:$0xff]
    %v56 = vld [vmem:[%s3 + $0x8] sm:$0xff]
    %v57 = vld [vmem:[%s3 + $0x10] sm:$0xff]
    %v58 = vld [vmem:[%s3 + $0x18] sm:$0xff]
    %v59 = vld [vmem:[%s3 + $0x20] sm:$0xff]
    %v60 = vld [vmem:[%s3 + $0x28] sm:$0xff]
    %v61 = vld [vmem:[%s3 + $0x30] sm:$0xff]
    %v62 = vld [vmem:[%s3 + $0x38] sm:$0xff]
    %v63 = vld [vmem:[%s3 + $0x40] sm:$0xff]
    %v64 = vld [vmem:[%s3 + $0x48] sm:$0xff]
    %v65 = vld [vmem:[%s3 + $0x50] sm:$0xff]
    %v66 = vld [vmem:[%s3 + $0x58] sm:$0xff]
    %v67 = vld [vmem:[%s3 + $0x60] sm:$0xff]
    %v68 = vld [vmem:[%s3 + $0x68] sm:$0xff]
    %v69 = vld [vmem:[%s3 + $0x70] sm:$0xff]
    %v70 = vld [vmem:[%s3 + $0x78] sm:$0xff]
    %v71 = vld [vmem:[%s4] sm:$0x1]
    %v73 = vperm.slane %v71, 0
    %75 = vmatpush.msra.mxu0 %v70
    %76 = vmatpush.msra.mxu0 %v69
    %77 = vmatpush.msra.mxu0 %v68
    %78 = vmatpush.msra.mxu0 %v67
    %79 = vmatpush.msra.mxu0 %v66
    %80 = vmatpush.msra.mxu0 %v65
    %81 = vmatpush.msra.mxu0 %v64
    %82 = vmatpush.msra.mxu0 %v63
    %83 = vmatpush.msra.mxu0 %v62
    %84 = vmatpush.msra.mxu0 %v61
    %85 = vmatpush.msra.mxu0 %v60
    %86 = vmatpush.msra.mxu0 %v59
    %87 = vmatpush.msra.mxu0 %v58
    %88 = vmatpush.msra.mxu0 %v57
    %89 = vmatpush.msra.mxu0 %v56
    %90 = vmatpush.msra.mxu0 %v55
    %91 = vmatmul.f32.gmra.mxu0 %v54
    %v92 = vpop.f32.mrf.mxu0
    %v93 = vadd.f32 %v73, %v92
    %94 = vdwg.mxu0
    %vm95 = vcmask 130048
    %96 = vst.msk [vmem:[#allocation2] sm:$0xff] %vm95, %v93
    // Predicated region
    $region22: #{mlp_forward.1} parent=1 // pred_check
      _
    $region23: #{mlp_forward.1} parent=1 // pred_check_branch
      %98 = sbr.rel (0) target = $region25
    $region24: #{mlp_forward.1} parent=1 // pred_region
      %100 = vsyncadd [#allocation3], 0
      %s102 = sshll.u32 [#allocation2], 4
      %s103 = int_to_ptr.vmem [resolvable:$true] %s102
      %s104 = sshll.u32 %s5, 4
      %s105 = int_to_ptr.hbm [resolvable:$true] %s104
      %107 = dma.vmem_to_hbm [thread:$0]  %s103, 128, %s105, [#allocation3]
    $region25: #{mlp_forward.1} parent=1 // pred_fallthru
      _
    // Predicated region
    $region26: #{mlp_forward.1} parent=1 // pred_check
      _
    $region27: #{mlp_forward.1} parent=1 // pred_check_branch
      %109 = sbr.rel (0) target = $region29
    $region28: #{mlp_forward.1} parent=1 // pred_region
      %111 = dma.done [#allocation3], 128
    $region29: #{mlp_forward.1} parent=1 // pred_fallthru
      _
    %112 = vsyncpa [#allocation3], 1

</llo_original>
